<compile_context>
chip_gen: v6e
topology: v6e:2x2x1
jax: 0.10.0
libtpu: 0.0.40
codegen_flags: <defaults>
</compile_context>

<pallas_src>
import functools

import jax
import jax.numpy as jnp
from jax.experimental import pallas as pl
from jax.experimental.pallas import tpu as pltpu


NAME2DIM = {"move": 5, "attack_target": 16}
INPUT_DIM = 64
_N_MOVE = NAME2DIM["move"]               # 5
_N_ATTACK = NAME2DIM["attack_target"]    # 16
_N_CAT = _N_MOVE + _N_ATTACK             # 21
_PALLAS_MIN_ROWS = 1024                  # below this, plain XLA fusion wins


def _round_up(v, m):
    return ((v + m - 1) // m) * m


def _action_head_kernel(x_ref, w_ref, b_ref, o_move_ref, o_attack_ref):
    """Fused heads for one row tile.

    x_ref        : (TM, 64)  input tile (f32 or bf16)
    w_ref        : (64, 21)  concatenated [W_move | W_attack], VMEM-resident
    b_ref        : (1, 21)   concatenated bias, f32, VMEM-resident
    o_move_ref   : (TM, 5)   f32
    o_attack_ref : (TM, 16)  f32
    """
    acc = jnp.dot(x_ref[...], w_ref[...], preferred_element_type=jnp.float32)
    acc = acc + b_ref[...]
    o_move_ref[...] = acc[:, :_N_MOVE]
    o_attack_ref[...] = acc[:, _N_MOVE:]


@functools.partial(jax.jit, static_argnames=("block_rows", "force_pallas"))
def action_head_forward(x, params, *, block_rows=8192, force_pallas=False):
    """x: (T, B, INPUT_DIM) f32 or bf16. Returns dict of (T, B, out_dim) f32."""
    T, B, K = x.shape
    assert K == INPUT_DIM
    M = T * B
    x2d = x.reshape(M, K)

    wm, bm = params["move"]            # (K, 5),  (1, 5)
    wa, ba = params["attack_target"]   # (K, 16), (1, 16)
    w_cat = jnp.concatenate([wm, wa], axis=1)                 # (K, 21)
    b_cat = jnp.concatenate([bm, ba], axis=1).astype(jnp.float32)  # (1, 21)

    if M < _PALLAS_MIN_ROWS and not force_pallas:
        # Tiny batch: launch overhead dominates; let XLA fuse it.
        out2d = jnp.dot(x2d, w_cat.astype(x2d.dtype),
                        preferred_element_type=jnp.float32) + b_cat
        out_move = out2d[:, :_N_MOVE]
        out_attack = out2d[:, _N_MOVE:]
    else:
        # Consume x in whatever dtype the producer delivered (no standalone
        # wrapper cast -- that would be an extra full HBM pass).  Only the
        # tiny (64, 21) weight is cast to match.
        in_dtype = x2d.dtype
        w_in = w_cat.astype(in_dtype)
        itemsize = jnp.dtype(in_dtype).itemsize
        align = 16 if itemsize < 4 else 8   # bf16 packs 2 rows / sublane

        tm = min(block_rows, _round_up(M, align))
        # Keep >= 2 grid steps when there is enough work so v7x's two
        # TensorCores both get a share of the "parallel" axis.
        if pl.cdiv(M, tm) < 2 and M > 2 * align:
            tm = _round_up(pl.cdiv(M, 2), align)
        grid = (pl.cdiv(M, tm),)   # ragged last block handled by Pallas

        cost = pl.CostEstimate(
            flops=2 * M * K * _N_CAT,
            transcendentals=0,
            bytes_accessed=(M * K * itemsize          # x read
                            + K * _N_CAT * itemsize   # weights
                            + _N_CAT * 4              # bias
                            + M * _N_CAT * 4),        # output writes
        )

        out_move, out_attack = pl.pallas_call(
            _action_head_kernel,
            out_shape=(jax.ShapeDtypeStruct((M, _N_MOVE), jnp.float32),
                       jax.ShapeDtypeStruct((M, _N_ATTACK), jnp.float32)),
            grid=grid,
            in_specs=[
                pl.BlockSpec((tm, K), lambda i: (i, 0)),      # x tile
                pl.BlockSpec((K, _N_CAT), lambda i: (0, 0)),  # W_cat (resident)
                pl.BlockSpec((1, _N_CAT), lambda i: (0, 0)),  # b_cat (resident)
            ],
            out_specs=(
                pl.BlockSpec((tm, _N_MOVE), lambda i: (i, 0)),
                pl.BlockSpec((tm, _N_ATTACK), lambda i: (i, 0)),
            ),
            compiler_params=pltpu.CompilerParams(
                dimension_semantics=("parallel",),
            ),
            cost_estimate=cost,
        )(x2d, w_in, b_cat)

    return {
        "move": out_move.reshape(T, B, _N_MOVE),
        "attack_target": out_attack.reshape(T, B, _N_ATTACK),
    }


def init_action_head_params(key, input_dim=INPUT_DIM):
    """Deterministic init mirroring nn.Linear default (uniform +-1/sqrt(in))."""
    params = {}
    bound = 1.0 / jnp.sqrt(jnp.float32(input_dim))
    for name, out_dim in NAME2DIM.items():
        key, kw, kb = jax.random.split(key, 3)
        # torch stores weight as (out, in); we keep (in, out) so kernel does x @ W.
        w = jax.random.uniform(kw, (input_dim, out_dim), jnp.float32,
                               minval=-bound, maxval=bound)
        b = jax.random.uniform(kb, (1, out_dim), jnp.float32,
                               minval=-bound, maxval=bound)
        params[name] = (w, b)
    return params


def _reference(x, params):
    x2d = x.astype(jnp.float32).reshape(-1, INPUT_DIM)
    ref_move = x2d @ params["move"][0] + params["move"][1]
    ref_attack = x2d @ params["attack_target"][0] + params["attack_target"][1]
    return ref_move, ref_attack


if __name__ == "__main__":
    key = jax.random.PRNGKey(0)
    k_x, k_x2, k_x3, k_p = jax.random.split(key, 4)
    params = init_action_head_params(k_p)

    # --- Pallas path: realistic batch (T*B = 1024 rows, 2 grid steps) --------
    T, B = 8, 128
    x = jax.random.normal(k_x, (T, B, INPUT_DIM), dtype=jnp.float32)
    out = action_head_forward(x, params)
    jax.block_until_ready(out)

    ref_move, ref_attack = _reference(x, params)
    assert out["move"].shape == (T, B, _N_MOVE)
    assert out["attack_target"].shape == (T, B, _N_ATTACK)
    assert jnp.allclose(out["move"].reshape(-1, _N_MOVE), ref_move, atol=1e-5)
    assert jnp.allclose(out["attack_target"].reshape(-1, _N_ATTACK),
                        ref_attack, atol=1e-5)

    # --- Ragged tail: M not a multiple of the row tile, forced Pallas --------
    T2, B2 = 3, 37   # M = 111, block_rows=64 -> grid=2, last block ragged
    x_rag = jax.random.normal(k_x2, (T2, B2, INPUT_DIM), dtype=jnp.float32)
    out_rag = action_head_forward(x_rag, params, block_rows=64,
                                  force_pallas=True)
    jax.block_until_ready(out_rag)
    ref_move_r, ref_attack_r = _reference(x_rag, params)
    assert jnp.allclose(out_rag["move"].reshape(-1, _N_MOVE), ref_move_r,
                        atol=1e-5)
    assert jnp.allclose(out_rag["attack_target"].reshape(-1, _N_ATTACK),
                        ref_attack_r, atol=1e-5)

    # --- Tiny batch via the XLA fallback dispatch -----------------------------
    T3, B3 = 2, 8
    x_small = jax.random.normal(k_x3, (T3, B3, INPUT_DIM), dtype=jnp.float32)
    out_fb = action_head_forward(x_small, params)
    jax.block_until_ready(out_fb)
    ref_move_s, ref_attack_s = _reference(x_small, params)
    assert jnp.allclose(out_fb["move"].reshape(-1, _N_MOVE), ref_move_s,
                        atol=1e-5)
    assert jnp.allclose(out_fb["attack_target"].reshape(-1, _N_ATTACK),
                        ref_attack_s, atol=1e-5)

    # --- bf16-from-producer path (no wrapper cast; looser tolerance) ---------
    x_bf = x.astype(jnp.bfloat16)   # stands in for an upstream bf16 producer
    out_bf = action_head_forward(x_bf, params, force_pallas=True)
    jax.block_until_ready(out_bf)
    assert out_bf["move"].dtype == jnp.float32
    assert jnp.allclose(out_bf["move"].reshape(-1, _N_MOVE), ref_move,
                        atol=3e-2)
    assert jnp.allclose(out_bf["attack_target"].reshape(-1, _N_ATTACK),
                        ref_attack, atol=3e-2)

    print("KERNEL_OK")
</pallas_src>

<mosaic_0001>
module attributes {stable_mosaic.version = 11 : i64} {
  func.func @_action_head_kernel(%arg0: i32, %arg1: memref<512x64xf32, #tpu.memory_space<vmem>>, %arg2: memref<64x21xf32, #tpu.memory_space<vmem>>, %arg3: memref<1x21xf32, #tpu.memory_space<vmem>>, %arg4: memref<512x5xf32, #tpu.memory_space<vmem>>, %arg5: memref<512x16xf32, #tpu.memory_space<vmem>>) attributes {dimension_semantics = [#tpu.dimension_semantics<parallel>], iteration_bounds = array<i64: 2>, scalar_prefetch = 0 : i64, scratch_operands = 0 : i64, tpu.core_type = #tpu.core_type<tc>, window_params = [{transform_indices = @transform_0, window_bounds = array<i64: 512, 64>}, {pipeline_mode = #tpu.pipeline_mode<synchronous>, transform_indices = @transform_1, window_bounds = array<i64: 64, 21>}, {pipeline_mode = #tpu.pipeline_mode<synchronous>, transform_indices = @transform_2, window_bounds = array<i64: 1, 21>}, {transform_indices = @transform_3, window_bounds = array<i64: 512, 5>}, {transform_indices = @transform_4, window_bounds = array<i64: 512, 16>}]} {
    %c0 = arith.constant 0 : index
    %c0_0 = arith.constant 0 : index
    %0 = vector.load %arg1[%c0, %c0_0] : memref<512x64xf32, #tpu.memory_space<vmem>>, vector<512x64xf32>
    %c0_1 = arith.constant 0 : index
    %c0_2 = arith.constant 0 : index
    %1 = vector.load %arg2[%c0_1, %c0_2] : memref<64x21xf32, #tpu.memory_space<vmem>>, vector<64x21xf32>
    %cst = arith.constant dense<0.000000e+00> : vector<512x21xf32>
    %2 = tpu.matmul %0, %1, %cst {dimension_numbers = #tpu.dot_dimension_numbers<[1], [0], [0], [1], [0, 0, 1, 1], [], []>} : vector<512x64xf32>, vector<64x21xf32>, vector<512x21xf32> -> vector<512x21xf32>
    %c0_3 = arith.constant 0 : index
    %c0_4 = arith.constant 0 : index
    %3 = vector.load %arg3[%c0_3, %c0_4] : memref<1x21xf32, #tpu.memory_space<vmem>>, vector<1x21xf32>
    %4 = vector.broadcast %3 : vector<1x21xf32> to vector<512x21xf32>
    %5 = arith.addf %2, %4 : vector<512x21xf32>
    %6 = vector.extract_strided_slice %5 {offsets = [0, 0], sizes = [512, 5], strides = [1, 1]} : vector<512x21xf32> to vector<512x5xf32>
    %c0_5 = arith.constant 0 : index
    %c0_6 = arith.constant 0 : index
    %7 = vector.load %arg4[%c0_5, %c0_6] : memref<512x5xf32, #tpu.memory_space<vmem>>, vector<512x5xf32>
    tpu.vector_store %arg4[%c0_5, %c0_6], %6 {strides = array<i32>} : memref<512x5xf32, #tpu.memory_space<vmem>>, vector<512x5xf32>,
    %8 = vector.extract_strided_slice %5 {offsets = [0, 5], sizes = [512, 16], strides = [1, 1]} : vector<512x21xf32> to vector<512x16xf32>
    %c0_7 = arith.constant 0 : index
    %c0_8 = arith.constant 0 : index
    %9 = vector.load %arg5[%c0_7, %c0_8] : memref<512x16xf32, #tpu.memory_space<vmem>>, vector<512x16xf32>
    tpu.vector_store %arg5[%c0_7, %c0_8], %8 {strides = array<i32>} : memref<512x16xf32, #tpu.memory_space<vmem>>, vector<512x16xf32>,
    return
  }
  func.func @transform_0(%arg0: i32) -> (i32, i32) {
    %c0_i32 = arith.constant 0 : i32
    %c0_i32_0 = arith.constant 0 : i32
    return %arg0, %c0_i32 : i32, i32
  }
  func.func @transform_1(%arg0: i32) -> (i32, i32) {
    %c0_i32 = arith.constant 0 : i32
    %c0_i32_0 = arith.constant 0 : i32
    %c0_i32_1 = arith.constant 0 : i32
    return %c0_i32, %c0_i32_0 : i32, i32
  }
  func.func @transform_2(%arg0: i32) -> (i32, i32) {
    %c0_i32 = arith.constant 0 : i32
    %c0_i32_0 = arith.constant 0 : i32
    %c0_i32_1 = arith.constant 0 : i32
    return %c0_i32, %c0_i32_0 : i32, i32
  }
  func.func @transform_3(%arg0: i32) -> (i32, i32) {
    %c0_i32 = arith.constant 0 : i32
    %c0_i32_0 = arith.constant 0 : i32
    return %arg0, %c0_i32 : i32, i32
  }
  func.func @transform_4(%arg0: i32) -> (i32, i32) {
    %c0_i32 = arith.constant 0 : i32
    %c0_i32_0 = arith.constant 0 : i32
    return %arg0, %c0_i32 : i32, i32
  }
}

</mosaic_0001>

<llo_original>
// kernel: action_head_forward.1
$region0: #{action_head_forward.1}
  #allocation0 [shape = 'u32[]', space=smem, size = 0x4, offset = 0x4, fixed_abs, tag = 'smem constant byte address 0x4 - core index']
  #allocation1 [shape = 'u32[144,128]{1,0:T(1,128)}', space=vmem, size = 0x12000, scoped, tag = 'internal scratch']
  %s0 = inlined_call_operand.vmem [shape: f32[1024,64], index: 0, kind: input, shape index: {}]
  %s1 = inlined_call_operand.vmem [shape: f32[64,21], index: 1, kind: input, shape index: {}]
  %s2 = inlined_call_operand.vmem [shape: f32[1,21], index: 2, kind: input, shape index: {}]
  %s3 = inlined_call_operand.vmem [shape: f32[1024,5], index: 3, kind: output, shape index: {0}]
  %s4 = inlined_call_operand.vmem [shape: f32[1024,16], index: 4, kind: output, shape index: {1}]
  %5 = xla_tuple %s3, %s4
  %s6 = sld [smem:[#allocation0]]
  $region53: #{action_head_forward.1} parent=0
    _
  %s8 = ssub.s32 1, %s6
  %s9 = scalar_select 0, %s8, %s6
  loop: start=0, step=1, limit=4
  $region2: #{action_head_forward.1} parent=0 // loop_pre_header
    _
  $region3: #{action_head_forward.1} parent=0 // loop_header
    %s11 = sphi 0, %s15
    %p12 = scmp.ge.s32.totalorder %s11, 4
    %s21 = sphi 0, %s23
    %s24 = sphi 0, %s21
    %s25 = sphi 0, %s24
    %s41 = sphi 0, %s25
    %s45 = sphi 0, %s45
    %s47 = sphi 0, %s45
    %s48 = sphi 0, %s47
    %s62 = sphi 0, %s48
    %s66 = sphi 0, %s66
    %s68 = sphi 0, %s66
    %s69 = sphi 0, %s68
    %s83 = sphi 0, %s69
    %s89 = sphi 0, %s91
    %s92 = sphi 0, %s89
    %s93 = sphi 0, %s92
    %s109 = sphi 0, %s93
    %s115 = sphi 0, %s117
    %s118 = sphi 0, %s115
    %s119 = sphi 0, %s118
    %s135 = sphi 0, %s119
  $region4: #{action_head_forward.1} parent=0 // loop_header_branch
    %14 = sbr.rel (%p12) target = $region8
  $region5: #{action_head_forward.1} parent=0 // loop_body
    %s16 = ssub.s32 %s11, 1
    %s17 = ssub.s32 %s11, 2
    %s18 = sadd.s32 %s11, 1
    %s19 = ssub.s32 %s11, %s18
    %p20 = scmp.eq.s32.totalorder %s19, 0
    %s22 = sadd.s32 %s21, 1
    %s23 = scalar_select %p20, %s21, %s22
    %p26 = pneg %p20
    %p27 = scmp.eq.s32.totalorder %s11, 1
    %p28 = por %p26, %p27
    %p29 = scmp.ne.s32.totalorder %s21, %s24
    %p30 = scmp.eq.s32.totalorder %s11, 0
    %p31 = por %p29, %p30
    %p32 = scmp.ne.s32.totalorder %s21, %s24
    %p33 = scmp.eq.s32.totalorder %s16, 1
    %p34 = por %p32, %p33
    %p35 = scmp.ne.s32.totalorder %s24, %s25
    %p36 = scmp.eq.s32.totalorder %s16, 0
    %p37 = por %p35, %p36
    %p38 = scmp.ne.s32.totalorder %s24, %s25
    %p39 = scmp.eq.s32.totalorder %s17, 1
    %p40 = por %p38, %p39
    %p42 = scmp.ne.s32.totalorder %s25, %s41
    %p43 = scmp.eq.s32.totalorder %s17, 0
    %p44 = por %p42, %p43
    %s46 = sadd.s32 %s45, 1
    %p49 = scmp.eq.s32.totalorder %s11, 1
    %p50 = scmp.ne.s32.totalorder %s45, %s47
    %p51 = scmp.eq.s32.totalorder %s11, 0
    %p52 = por %p50, %p51
    %p53 = scmp.ne.s32.totalorder %s45, %s47
    %p54 = scmp.eq.s32.totalorder %s16, 1
    %p55 = por %p53, %p54
    %p56 = scmp.ne.s32.totalorder %s47, %s48
    %p57 = scmp.eq.s32.totalorder %s16, 0
    %p58 = por %p56, %p57
    %p59 = scmp.ne.s32.totalorder %s47, %s48
    %p60 = scmp.eq.s32.totalorder %s17, 1
    %p61 = por %p59, %p60
    %p63 = scmp.ne.s32.totalorder %s48, %s62
    %p64 = scmp.eq.s32.totalorder %s17, 0
    %p65 = por %p63, %p64
    %s67 = sadd.s32 %s66, 1
    %p70 = scmp.eq.s32.totalorder %s11, 1
    %p71 = scmp.ne.s32.totalorder %s66, %s68
    %p72 = scmp.eq.s32.totalorder %s11, 0
    %p73 = por %p71, %p72
    %p74 = scmp.ne.s32.totalorder %s66, %s68
    %p75 = scmp.eq.s32.totalorder %s16, 1
    %p76 = por %p74, %p75
    %p77 = scmp.ne.s32.totalorder %s68, %s69
    %p78 = scmp.eq.s32.totalorder %s16, 0
    %p79 = por %p77, %p78
    %p80 = scmp.ne.s32.totalorder %s68, %s69
    %p81 = scmp.eq.s32.totalorder %s17, 1
    %p82 = por %p80, %p81
    %p84 = scmp.ne.s32.totalorder %s69, %s83
    %p85 = scmp.eq.s32.totalorder %s17, 0
    %p86 = por %p84, %p85
    %s87 = ssub.s32 %s11, %s18
    %p88 = scmp.eq.s32.totalorder %s87, 0
    %s90 = sadd.s32 %s89, 1
    %s91 = scalar_select %p88, %s89, %s90
    %p94 = pneg %p88
    %p95 = scmp.eq.s32.totalorder %s11, 1
    %p96 = por %p94, %p95
    %p97 = scmp.ne.s32.totalorder %s89, %s92
    %p98 = scmp.eq.s32.totalorder %s11, 0
    %p99 = por %p97, %p98
    %p100 = scmp.ne.s32.totalorder %s89, %s92
    %p101 = scmp.eq.s32.totalorder %s16, 1
    %p102 = por %p100, %p101
    %p103 = scmp.ne.s32.totalorder %s92, %s93
    %p104 = scmp.eq.s32.totalorder %s16, 0
    %p105 = por %p103, %p104
    %p106 = scmp.ne.s32.totalorder %s92, %s93
    %p107 = scmp.eq.s32.totalorder %s17, 1
    %p108 = por %p106, %p107
    %p110 = scmp.ne.s32.totalorder %s93, %s109
    %p111 = scmp.eq.s32.totalorder %s17, 0
    %p112 = por %p110, %p111
    %s113 = ssub.s32 %s11, %s18
    %p114 = scmp.eq.s32.totalorder %s113, 0
    %s116 = sadd.s32 %s115, 1
    %s117 = scalar_select %p114, %s115, %s116
    %p120 = pneg %p114
    %p121 = scmp.eq.s32.totalorder %s11, 1
    %p122 = por %p120, %p121
    %p123 = scmp.ne.s32.totalorder %s115, %s118
    %p124 = scmp.eq.s32.totalorder %s11, 0
    %p125 = por %p123, %p124
    %p126 = scmp.ne.s32.totalorder %s115, %s118
    %p127 = scmp.eq.s32.totalorder %s16, 1
    %p128 = por %p126, %p127
    %p129 = scmp.ne.s32.totalorder %s118, %s119
    %p130 = scmp.eq.s32.totalorder %s16, 0
    %p131 = por %p129, %p130
    %p132 = scmp.ne.s32.totalorder %s118, %s119
    %p133 = scmp.eq.s32.totalorder %s17, 1
    %p134 = por %p132, %p133
    %p136 = scmp.ne.s32.totalorder %s119, %s135
    %p137 = scmp.eq.s32.totalorder %s17, 0
    %p138 = por %p136, %p137
    %p139 = scmp.le.s32.totalorder 1, %s11
    %p140 = scmp.lt.s32.totalorder %s11, 3
    %p141 = pnand %p139, %p140
    %p142 = pneg %p141
    // Predicated region
    $region9: #{action_head_forward.1} parent=5 // pred_check
      _
    $region10: #{action_head_forward.1} parent=5 // pred_check_branch
      %144 = sbr.rel (%p141) target = $region12
    $region11: #{action_head_forward.1} parent=5 // pred_region
      %s145 = ssub.s32 %s11, 1
      // Predicated region
      $region13: #{action_head_forward.1} parent=11 // pred_check
        %p146 = pneg %p58
      $region14: #{action_head_forward.1} parent=11 // pred_check_branch
        %148 = sbr.rel (%p146) target = $region16
      $region15: #{action_head_forward.1} parent=11 // pred_region
        _
      $region16: #{action_head_forward.1} parent=11 // pred_fallthru
        _
      // Predicated region
      $region17: #{action_head_forward.1} parent=11 // pred_check
        %p149 = pneg %p79
      $region18: #{action_head_forward.1} parent=11 // pred_check_branch
        %151 = sbr.rel (%p149) target = $region20
      $region19: #{action_head_forward.1} parent=11 // pred_region
        _
      $region20: #{action_head_forward.1} parent=11 // pred_fallthru
        _
    $region12: #{action_head_forward.1} parent=5 // pred_fallthru
      _
    %p152 = scmp.lt.s32.totalorder %s11, 2
    // Predicated region
    $region21: #{action_head_forward.1} parent=5 // pred_check
      %p153 = pneg %p152
    $region22: #{action_head_forward.1} parent=5 // pred_check_branch
      %155 = sbr.rel (%p153) target = $region24
    $region23: #{action_head_forward.1} parent=5 // pred_region
      // Predicated region
      $region25: #{action_head_forward.1} parent=23 // pred_check
        %p156 = pneg %p31
      $region26: #{action_head_forward.1} parent=23 // pred_check_branch
        %158 = sbr.rel (%p156) target = $region28
      $region27: #{action_head_forward.1} parent=23 // pred_region
        %s159 = smul.u32 64, %s11
        %p160 = scmp.lt.s32.totalorder %s159, 127
        %s161 = scalar_select %p160, %s159, 127
        %s162 = smul.addr %s161, 8
        %s163 = scalar_lea.vmem %s0, %s162
        %s164 = smul.u32 64, %s11
      $region28: #{action_head_forward.1} parent=23 // pred_fallthru
        _
    $region24: #{action_head_forward.1} parent=5 // pred_fallthru
      _
    %p165 = scmp.le.s32.totalorder 1, %s11
    %p166 = scmp.lt.s32.totalorder %s11, 3
    %p167 = pnand %p165, %p166
    %p168 = pneg %p167
    // Predicated region
    $region29: #{action_head_forward.1} parent=5 // pred_check
      _
    $region30: #{action_head_forward.1} parent=5 // pred_check_branch
      %170 = sbr.rel (%p167) target = $region32
    $region31: #{action_head_forward.1} parent=5 // pred_region
      %s171 = ssub.s32 %s11, 1
      %s172 = smul.u32 64, %s16
      %p173 = scmp.lt.s32.totalorder %s172, 127
      %s174 = scalar_select %p173, %s172, 127
      %s175 = smul.addr %s174, 8
      %s176 = scalar_lea.vmem %s0, %s175
      %p177 = pneg %p37
      %p178 = pneg %p34
      %p179 = pneg %p58
      %p180 = pneg %p55
      %p181 = pneg %p79
      %p182 = pneg %p76
      %p183 = pneg %p105
      %p184 = pneg %p102
      %s185 = smul.u32 64, %s16
      %p186 = scmp.lt.s32.totalorder %s185, 127
      %s187 = scalar_select %p186, %s185, 127
      %s188 = smul.addr %s187, 8
      %s189 = scalar_lea.vmem %s3, %s188
      %p190 = pneg %p131
      %p191 = pneg %p128
      %s192 = smul.u32 64, %s16
      %p193 = scmp.lt.s32.totalorder %s192, 127
      %s194 = scalar_select %p193, %s192, 127
      %s195 = smul.addr %s194, 8
      %s196 = scalar_lea.vmem %s4, %s195
      %s197 = smul.u32 64, %s16
      %p198 = scmp.lt.s32.totalorder %s197, 127
      %s199 = scalar_select %p198, %s197, 127
      %s200 = smul.addr %s199, 8
      %s201 = scalar_lea.vmem %s0, %s200
      %s202 = smul.u32 64, %s16
      %s203 = smul.u32 64, %s16
      %p204 = scmp.lt.s32.totalorder %s203, 127
      %s205 = scalar_select %p204, %s203, 127
      %s206 = smul.addr %s205, 8
      %s207 = scalar_lea.vmem %s3, %s206
      %s208 = smul.u32 64, %s16
      %s209 = smul.u32 64, %s16
      %p210 = scmp.lt.s32.totalorder %s209, 127
      %s211 = scalar_select %p210, %s209, 127
      %s212 = smul.addr %s211, 8
      %s213 = scalar_lea.vmem %s4, %s212
      %s214 = smul.u32 64, %s16
      %v215 = vld [vmem:[%s201] sm:$0xff]
      %v216 = vld [vmem:[%s201 + $0x8] sm:$0xff]
      %v217 = vld [vmem:[%s201 + $0x10] sm:$0xff]
      %v218 = vld [vmem:[%s201 + $0x18] sm:$0xff]
      %v219 = vld [vmem:[%s201 + $0x20] sm:$0xff]
      %v220 = vld [vmem:[%s201 + $0x28] sm:$0xff]
      %v221 = vld [vmem:[%s201 + $0x30] sm:$0xff]
      %v222 = vld [vmem:[%s201 + $0x38] sm:$0xff]
      %v223 = vld [vmem:[%s201 + $0x40] sm:$0xff]
      %v224 = vld [vmem:[%s201 + $0x48] sm:$0xff]
      %v225 = vld [vmem:[%s201 + $0x50] sm:$0xff]
      %v226 = vld [vmem:[%s201 + $0x58] sm:$0xff]
      %v227 = vld [vmem:[%s201 + $0x60] sm:$0xff]
      %v228 = vld [vmem:[%s201 + $0x68] sm:$0xff]
      %v229 = vld [vmem:[%s201 + $0x70] sm:$0xff]
      %v230 = vld [vmem:[%s201 + $0x78] sm:$0xff]
      %v231 = vld [vmem:[%s201 + $0x80] sm:$0xff]
      %v232 = vld [vmem:[%s201 + $0x88] sm:$0xff]
      %v233 = vld [vmem:[%s201 + $0x90] sm:$0xff]
      %v234 = vld [vmem:[%s201 + $0x98] sm:$0xff]
      %v235 = vld [vmem:[%s201 + $0xa0] sm:$0xff]
      %v236 = vld [vmem:[%s201 + $0xa8] sm:$0xff]
      %v237 = vld [vmem:[%s201 + $0xb0] sm:$0xff]
      %v238 = vld [vmem:[%s201 + $0xb8] sm:$0xff]
      %v239 = vld [vmem:[%s201 + $0xc0] sm:$0xff]
      %v240 = vld [vmem:[%s201 + $0xc8] sm:$0xff]
      %v241 = vld [vmem:[%s201 + $0xd0] sm:$0xff]
      %v242 = vld [vmem:[%s201 + $0xd8] sm:$0xff]
      %v243 = vld [vmem:[%s201 + $0xe0] sm:$0xff]
      %v244 = vld [vmem:[%s201 + $0xe8] sm:$0xff]
      %v245 = vld [vmem:[%s201 + $0xf0] sm:$0xff]
      %v246 = vld [vmem:[%s201 + $0xf8] sm:$0xff]
      %v247 = vld [vmem:[%s201 + $0x100] sm:$0xff]
      %v248 = vld [vmem:[%s201 + $0x108] sm:$0xff]
      %v249 = vld [vmem:[%s201 + $0x110] sm:$0xff]
      %v250 = vld [vmem:[%s201 + $0x118] sm:$0xff]
      %v251 = vld [vmem:[%s201 + $0x120] sm:$0xff]
      %v252 = vld [vmem:[%s201 + $0x128] sm:$0xff]
      %v253 = vld [vmem:[%s201 + $0x130] sm:$0xff]
      %v254 = vld [vmem:[%s201 + $0x138] sm:$0xff]
      %v255 = vld [vmem:[%s201 + $0x140] sm:$0xff]
      %v256 = vld [vmem:[%s201 + $0x148] sm:$0xff]
      %v257 = vld [vmem:[%s201 + $0x150] sm:$0xff]
      %v258 = vld [vmem:[%s201 + $0x158] sm:$0xff]
      %v259 = vld [vmem:[%s201 + $0x160] sm:$0xff]
      %v260 = vld [vmem:[%s201 + $0x168] sm:$0xff]
      %v261 = vld [vmem:[%s201 + $0x170] sm:$0xff]
      %v262 = vld [vmem:[%s201 + $0x178] sm:$0xff]
      %v263 = vld [vmem:[%s201 + $0x180] sm:$0xff]
      %v264 = vld [vmem:[%s201 + $0x188] sm:$0xff]
      %v265 = vld [vmem:[%s201 + $0x190] sm:$0xff]
      %v266 = vld [vmem:[%s201 + $0x198] sm:$0xff]
      %v267 = vld [vmem:[%s201 + $0x1a0] sm:$0xff]
      %v268 = vld [vmem:[%s201 + $0x1a8] sm:$0xff]
      %v269 = vld [vmem:[%s201 + $0x1b0] sm:$0xff]
      %v270 = vld [vmem:[%s201 + $0x1b8] sm:$0xff]
      %v271 = vld [vmem:[%s201 + $0x1c0] sm:$0xff]
      %v272 = vld [vmem:[%s201 + $0x1c8] sm:$0xff]
      %v273 = vld [vmem:[%s201 + $0x1d0] sm:$0xff]
      %v274 = vld [vmem:[%s201 + $0x1d8] sm:$0xff]
      %v275 = vld [vmem:[%s201 + $0x1e0] sm:$0xff]
      %v276 = vld [vmem:[%s201 + $0x1e8] sm:$0xff]
      %v277 = vld [vmem:[%s201 + $0x1f0] sm:$0xff]
      %v278 = vld [vmem:[%s201 + $0x1f8] sm:$0xff]
      %v279 = vld [vmem:[%s1] sm:$0xff]
      %v280 = vld [vmem:[%s1 + $0x8] sm:$0xff]
      %v281 = vld [vmem:[%s1 + $0x10] sm:$0xff]
      %v282 = vld [vmem:[%s1 + $0x18] sm:$0xff]
      %v283 = vld [vmem:[%s1 + $0x20] sm:$0xff]
      %v284 = vld [vmem:[%s1 + $0x28] sm:$0xff]
      %v285 = vld [vmem:[%s1 + $0x30] sm:$0xff]
      %v286 = vld [vmem:[%s1 + $0x38] sm:$0xff]
      %v287 = vld [vmem:[%s2] sm:$0x1]
      %v289 = vlaneseq
      %v290 = vshrl.u32 %v289, 7
      %v291 = vsub.s32 0, %v290
      %v292 = vrot.slane %v287, %v291
      %vm294 = vcmask 523264
      %v296 = vsel %vm294, %v215, 0
      %v299 = vsel %vm294, %v216, 0
      %v302 = vsel %vm294, %v217, 0
      %v305 = vsel %vm294, %v218, 0
      %v308 = vsel %vm294, %v219, 0
      %v311 = vsel %vm294, %v220, 0
      %v314 = vsel %vm294, %v221, 0
      %v317 = vsel %vm294, %v222, 0
      %v320 = vsel %vm294, %v223, 0
      %v323 = vsel %vm294, %v224, 0
      %v326 = vsel %vm294, %v225, 0
      %v329 = vsel %vm294, %v226, 0
      %v332 = vsel %vm294, %v227, 0
      %v335 = vsel %vm294, %v228, 0
      %v338 = vsel %vm294, %v229, 0
      %v341 = vsel %vm294, %v230, 0
      %v344 = vsel %vm294, %v231, 0
      %v347 = vsel %vm294, %v232, 0
      %v350 = vsel %vm294, %v233, 0
      %v353 = vsel %vm294, %v234, 0
      %v356 = vsel %vm294, %v235, 0
      %v359 = vsel %vm294, %v236, 0
      %v362 = vsel %vm294, %v237, 0
      %v365 = vsel %vm294, %v238, 0
      %v368 = vsel %vm294, %v239, 0
      %v371 = vsel %vm294, %v240, 0
      %v374 = vsel %vm294, %v241, 0
      %v377 = vsel %vm294, %v242, 0
      %v380 = vsel %vm294, %v243, 0
      %v383 = vsel %vm294, %v244, 0
      %v386 = vsel %vm294, %v245, 0
      %v389 = vsel %vm294, %v246, 0
      %v392 = vsel %vm294, %v247, 0
      %v395 = vsel %vm294, %v248, 0
      %v398 = vsel %vm294, %v249, 0
      %v401 = vsel %vm294, %v250, 0
      %v404 = vsel %vm294, %v251, 0
      %v407 = vsel %vm294, %v252, 0
      %v410 = vsel %vm294, %v253, 0
      %v413 = vsel %vm294, %v254, 0
      %v416 = vsel %vm294, %v255, 0
      %v419 = vsel %vm294, %v256, 0
      %v422 = vsel %vm294, %v257, 0
      %v425 = vsel %vm294, %v258, 0
      %v428 = vsel %vm294, %v259, 0
      %v431 = vsel %vm294, %v260, 0
      %v434 = vsel %vm294, %v261, 0
      %v437 = vsel %vm294, %v262, 0
      %v440 = vsel %vm294, %v263, 0
      %v443 = vsel %vm294, %v264, 0
      %v446 = vsel %vm294, %v265, 0
      %v449 = vsel %vm294, %v266, 0
      %v452 = vsel %vm294, %v267, 0
      %v455 = vsel %vm294, %v268, 0
      %v458 = vsel %vm294, %v269, 0
      %v461 = vsel %vm294, %v270, 0
      %v464 = vsel %vm294, %v271, 0
      %v467 = vsel %vm294, %v272, 0
      %v470 = vsel %vm294, %v273, 0
      %v473 = vsel %vm294, %v274, 0
      %v476 = vsel %vm294, %v275, 0
      %v479 = vsel %vm294, %v276, 0
      %v482 = vsel %vm294, %v277, 0
      %v485 = vsel %vm294, %v278, 0
      %487 = vmatprep.subr.mxu0 0.0
      %488 = vmatpush1.msra.mxu0 0.0
      %489 = vmatprep.subr.mxu0 0.0
      %490 = vmatpush1.msra.mxu0 0.0
      %491 = vmatprep.subr.mxu0 0.0
      %492 = vmatpush1.msra.mxu0 0.0
      %493 = vmatprep.subr.mxu0 0.0
      %494 = vmatpush1.msra.mxu0 0.0
      %495 = vmatprep.subr.mxu0 0.0
      %496 = vmatpush1.msra.mxu0 0.0
      %497 = vmatprep.subr.mxu0 0.0
      %498 = vmatpush1.msra.mxu0 0.0
      %499 = vmatprep.subr.mxu0 0.0
      %500 = vmatpush1.msra.mxu0 0.0
      %501 = vmatprep.subr.mxu0 0.0
      %502 = vmatpush1.msra.mxu0 0.0
      %503 = vmatprep.subr.mxu0 0.0
      %504 = vmatpush1.msra.mxu0 %v286
      %505 = vmatprep.subr.mxu0 0.0
      %506 = vmatpush1.msra.mxu0 %v285
      %507 = vmatprep.subr.mxu0 0.0
      %508 = vmatpush1.msra.mxu0 %v284
      %509 = vmatprep.subr.mxu0 0.0
      %510 = vmatpush1.msra.mxu0 %v283
      %511 = vmatprep.subr.mxu0 0.0
      %512 = vmatpush1.msra.mxu0 %v282
      %513 = vmatprep.subr.mxu0 0.0
      %514 = vmatpush1.msra.mxu0 %v281
      %515 = vmatprep.subr.mxu0 0.0
      %516 = vmatpush1.msra.mxu0 %v280
      %517 = vmatprep.subr.mxu0 0.0
      %518 = vmatpush1.msra.mxu0 %v279
      %519 = vmatprep.subr.mxu0 0.0
      %520 = vmatpush2.msra.mxu0 0.0
      %521 = vmatprep.subr.mxu0 0.0
      %522 = vmatpush2.msra.mxu0 0.0
      %523 = vmatprep.subr.mxu0 0.0
      %524 = vmatpush2.msra.mxu0 0.0
      %525 = vmatprep.subr.mxu0 0.0
      %526 = vmatpush2.msra.mxu0 0.0
      %527 = vmatprep.subr.mxu0 0.0
      %528 = vmatpush2.msra.mxu0 0.0
      %529 = vmatprep.subr.mxu0 0.0
      %530 = vmatpush2.msra.mxu0 0.0
      %531 = vmatprep.subr.mxu0 0.0
      %532 = vmatpush2.msra.mxu0 0.0
      %533 = vmatprep.subr.mxu0 0.0
      %534 = vmatpush2.msra.mxu0 0.0
      %535 = vmatprep.subr.mxu0 0.0
      %536 = vmatpush2.msra.mxu0 0.0
      %537 = vmatprep.subr.mxu0 0.0
      %538 = vmatpush2.msra.mxu0 0.0
      %539 = vmatprep.subr.mxu0 0.0
      %540 = vmatpush2.msra.mxu0 0.0
      %541 = vmatprep.subr.mxu0 0.0
      %542 = vmatpush2.msra.mxu0 0.0
      %543 = vmatprep.subr.mxu0 0.0
      %544 = vmatpush2.msra.mxu0 0.0
      %545 = vmatprep.subr.mxu0 0.0
      %546 = vmatpush2.msra.mxu0 0.0
      %547 = vmatprep.subr.mxu0 0.0
      %548 = vmatpush2.msra.mxu0 0.0
      %549 = vmatprep.subr.mxu0 0.0
      %550 = vmatpush2.msra.mxu0 0.0
      %551 = vmatprep.mubr.f32.mxu0 0.0
      %552 = vmatmul.mubr.f32.gmra.mxu0 %v296
      %v553 = vpop.f32.mrf.mxu0
      %v554 = vadd.f32 %v292, %v553
      %v555 = vpop.f32.mrf.mxu0
      %556 = vmatprep.mubr.f32.mxu0 0.0
      %557 = vmatmul.mubr.f32.gmra.mxu0 %v299
      %v558 = vpop.f32.mrf.mxu0
      %v559 = vadd.f32 %v292, %v558
      %v560 = vpop.f32.mrf.mxu0
      %561 = vmatprep.mubr.f32.mxu0 0.0
      %562 = vmatmul.mubr.f32.gmra.mxu0 %v302
      %v563 = vpop.f32.mrf.mxu0
      %v564 = vadd.f32 %v292, %v563
      %v565 = vpop.f32.mrf.mxu0
      %566 = vmatprep.mubr.f32.mxu0 0.0
      %567 = vmatmul.mubr.f32.gmra.mxu0 %v305
      %v568 = vpop.f32.mrf.mxu0
      %v569 = vadd.f32 %v292, %v568
      %v570 = vpop.f32.mrf.mxu0
      %571 = vmatprep.mubr.f32.mxu0 0.0
      %572 = vmatmul.mubr.f32.gmra.mxu0 %v308
      %v573 = vpop.f32.mrf.mxu0
      %v574 = vadd.f32 %v292, %v573
      %v575 = vpop.f32.mrf.mxu0
      %576 = vmatprep.mubr.f32.mxu0 0.0
      %577 = vmatmul.mubr.f32.gmra.mxu0 %v311
      %v578 = vpop.f32.mrf.mxu0
      %v579 = vadd.f32 %v292, %v578
      %v580 = vpop.f32.mrf.mxu0
      %581 = vmatprep.mubr.f32.mxu0 0.0
      %582 = vmatmul.mubr.f32.gmra.mxu0 %v314
      %v583 = vpop.f32.mrf.mxu0
      %v584 = vadd.f32 %v292, %v583
      %v585 = vpop.f32.mrf.mxu0
      %586 = vmatprep.mubr.f32.mxu0 0.0
      %587 = vmatmul.mubr.f32.gmra.mxu0 %v317
      %v588 = vpop.f32.mrf.mxu0
      %v589 = vadd.f32 %v292, %v588
      %v590 = vpop.f32.mrf.mxu0
      %591 = vmatprep.mubr.f32.mxu0 0.0
      %592 = vmatmul.mubr.f32.gmra.mxu0 %v320
      %v593 = vpop.f32.mrf.mxu0
      %v594 = vadd.f32 %v292, %v593
      %v595 = vpop.f32.mrf.mxu0
      %596 = vmatprep.mubr.f32.mxu0 0.0
      %597 = vmatmul.mubr.f32.gmra.mxu0 %v323
      %v598 = vpop.f32.mrf.mxu0
      %v599 = vadd.f32 %v292, %v598
      %v600 = vpop.f32.mrf.mxu0
      %601 = vmatprep.mubr.f32.mxu0 0.0
      %602 = vmatmul.mubr.f32.gmra.mxu0 %v326
      %v603 = vpop.f32.mrf.mxu0
      %v604 = vadd.f32 %v292, %v603
      %v605 = vpop.f32.mrf.mxu0
      %606 = vmatprep.mubr.f32.mxu0 0.0
      %607 = vmatmul.mubr.f32.gmra.mxu0 %v329
      %v608 = vpop.f32.mrf.mxu0
      %v609 = vadd.f32 %v292, %v608
      %v610 = vpop.f32.mrf.mxu0
      %611 = vmatprep.mubr.f32.mxu0 0.0
      %612 = vmatmul.mubr.f32.gmra.mxu0 %v332
      %v613 = vpop.f32.mrf.mxu0
      %v614 = vadd.f32 %v292, %v613
      %v615 = vpop.f32.mrf.mxu0
      %616 = vmatprep.mubr.f32.mxu0 0.0
      %617 = vmatmul.mubr.f32.gmra.mxu0 %v335
      %v618 = vpop.f32.mrf.mxu0
      %v619 = vadd.f32 %v292, %v618
      %v620 = vpop.f32.mrf.mxu0
      %621 = vmatprep.mubr.f32.mxu0 0.0
      %622 = vmatmul.mubr.f32.gmra.mxu0 %v338
      %v623 = vpop.f32.mrf.mxu0
      %v624 = vadd.f32 %v292, %v623
      %v625 = vpop.f32.mrf.mxu0
      %626 = vmatprep.mubr.f32.mxu0 0.0
      %627 = vmatmul.mubr.f32.gmra.mxu0 %v341
      %v628 = vpop.f32.mrf.mxu0
      %v629 = vadd.f32 %v292, %v628
      %v630 = vpop.f32.mrf.mxu0
      %631 = vmatprep.mubr.f32.mxu0 0.0
      %632 = vmatmul.mubr.f32.gmra.mxu0 %v344
      %v633 = vpop.f32.mrf.mxu0
      %v634 = vadd.f32 %v292, %v633
      %v635 = vpop.f32.mrf.mxu0
      %636 = vmatprep.mubr.f32.mxu0 0.0
      %637 = vmatmul.mubr.f32.gmra.mxu0 %v347
      %v638 = vpop.f32.mrf.mxu0
      %v639 = vadd.f32 %v292, %v638
      %v640 = vpop.f32.mrf.mxu0
      %641 = vmatprep.mubr.f32.mxu0 0.0
      %642 = vmatmul.mubr.f32.gmra.mxu0 %v350
      %v643 = vpop.f32.mrf.mxu0
      %v644 = vadd.f32 %v292, %v643
      %v645 = vpop.f32.mrf.mxu0
      %646 = vmatprep.mubr.f32.mxu0 0.0
      %647 = vmatmul.mubr.f32.gmra.mxu0 %v353
      %v648 = vpop.f32.mrf.mxu0
      %v649 = vadd.f32 %v292, %v648
      %v650 = vpop.f32.mrf.mxu0
      %651 = vmatprep.mubr.f32.mxu0 0.0
      %652 = vmatmul.mubr.f32.gmra.mxu0 %v356
      %v653 = vpop.f32.mrf.mxu0
      %v654 = vadd.f32 %v292, %v653
      %v655 = vpop.f32.mrf.mxu0
      %656 = vmatprep.mubr.f32.mxu0 0.0
      %657 = vmatmul.mubr.f32.gmra.mxu0 %v359
      %v658 = vpop.f32.mrf.mxu0
      %v659 = vadd.f32 %v292, %v658
      %v660 = vpop.f32.mrf.mxu0
      %661 = vmatprep.mubr.f32.mxu0 0.0
      %662 = vmatmul.mubr.f32.gmra.mxu0 %v362
      %v663 = vpop.f32.mrf.mxu0
      %v664 = vadd.f32 %v292, %v663
      %v665 = vpop.f32.mrf.mxu0
      %666 = vmatprep.mubr.f32.mxu0 0.0
      %667 = vmatmul.mubr.f32.gmra.mxu0 %v365
      %v668 = vpop.f32.mrf.mxu0
      %v669 = vadd.f32 %v292, %v668
      %v670 = vpop.f32.mrf.mxu0
      %671 = vmatprep.mubr.f32.mxu0 0.0
      %672 = vmatmul.mubr.f32.gmra.mxu0 %v368
      %v673 = vpop.f32.mrf.mxu0
      %v674 = vadd.f32 %v292, %v673
      %v675 = vpop.f32.mrf.mxu0
      %676 = vmatprep.mubr.f32.mxu0 0.0
      %677 = vmatmul.mubr.f32.gmra.mxu0 %v371
      %v678 = vpop.f32.mrf.mxu0
      %v679 = vadd.f32 %v292, %v678
      %v680 = vpop.f32.mrf.mxu0
      %681 = vmatprep.mubr.f32.mxu0 0.0
      %682 = vmatmul.mubr.f32.gmra.mxu0 %v374
      %v683 = vpop.f32.mrf.mxu0
      %v684 = vadd.f32 %v292, %v683
      %v685 = vpop.f32.mrf.mxu0
      %686 = vmatprep.mubr.f32.mxu0 0.0
      %687 = vmatmul.mubr.f32.gmra.mxu0 %v377
      %v688 = vpop.f32.mrf.mxu0
      %v689 = vadd.f32 %v292, %v688
      %v690 = vpop.f32.mrf.mxu0
      %691 = vmatprep.mubr.f32.mxu0 0.0
      %692 = vmatmul.mubr.f32.gmra.mxu0 %v380
      %v693 = vpop.f32.mrf.mxu0
      %v694 = vadd.f32 %v292, %v693
      %v695 = vpop.f32.mrf.mxu0
      %696 = vmatprep.mubr.f32.mxu0 0.0
      %697 = vmatmul.mubr.f32.gmra.mxu0 %v383
      %v698 = vpop.f32.mrf.mxu0
      %v699 = vadd.f32 %v292, %v698
      %v700 = vpop.f32.mrf.mxu0
      %701 = vmatprep.mubr.f32.mxu0 0.0
      %702 = vmatmul.mubr.f32.gmra.mxu0 %v386
      %v703 = vpop.f32.mrf.mxu0
      %v704 = vadd.f32 %v292, %v703
      %v705 = vpop.f32.mrf.mxu0
      %706 = vmatprep.mubr.f32.mxu0 0.0
      %707 = vmatmul.mubr.f32.gmra.mxu0 %v389
      %v708 = vpop.f32.mrf.mxu0
      %v709 = vadd.f32 %v292, %v708
      %v710 = vpop.f32.mrf.mxu0
      %711 = vmatprep.mubr.f32.mxu0 0.0
      %712 = vmatmul.mubr.f32.gmra.mxu0 %v392
      %v713 = vpop.f32.mrf.mxu0
      %v714 = vadd.f32 %v292, %v713
      %v715 = vpop.f32.mrf.mxu0
      %716 = vmatprep.mubr.f32.mxu0 0.0
      %717 = vmatmul.mubr.f32.gmra.mxu0 %v395
      %v718 = vpop.f32.mrf.mxu0
      %v719 = vadd.f32 %v292, %v718
      %v720 = vpop.f32.mrf.mxu0
      %721 = vmatprep.mubr.f32.mxu0 0.0
      %722 = vmatmul.mubr.f32.gmra.mxu0 %v398
      %v723 = vpop.f32.mrf.mxu0
      %v724 = vadd.f32 %v292, %v723
      %v725 = vpop.f32.mrf.mxu0
      %726 = vmatprep.mubr.f32.mxu0 0.0
      %727 = vmatmul.mubr.f32.gmra.mxu0 %v401
      %v728 = vpop.f32.mrf.mxu0
      %v729 = vadd.f32 %v292, %v728
      %v730 = vpop.f32.mrf.mxu0
      %731 = vmatprep.mubr.f32.mxu0 0.0
      %732 = vmatmul.mubr.f32.gmra.mxu0 %v404
      %v733 = vpop.f32.mrf.mxu0
      %v734 = vadd.f32 %v292, %v733
      %v735 = vpop.f32.mrf.mxu0
      %736 = vmatprep.mubr.f32.mxu0 0.0
      %737 = vmatmul.mubr.f32.gmra.mxu0 %v407
      %v738 = vpop.f32.mrf.mxu0
      %v739 = vadd.f32 %v292, %v738
      %v740 = vpop.f32.mrf.mxu0
      %741 = vmatprep.mubr.f32.mxu0 0.0
      %742 = vmatmul.mubr.f32.gmra.mxu0 %v410
      %v743 = vpop.f32.mrf.mxu0
      %v744 = vadd.f32 %v292, %v743
      %v745 = vpop.f32.mrf.mxu0
      %746 = vmatprep.mubr.f32.mxu0 0.0
      %747 = vmatmul.mubr.f32.gmra.mxu0 %v413
      %v748 = vpop.f32.mrf.mxu0
      %v749 = vadd.f32 %v292, %v748
      %v750 = vpop.f32.mrf.mxu0
      %751 = vmatprep.mubr.f32.mxu0 0.0
      %752 = vmatmul.mubr.f32.gmra.mxu0 %v416
      %v753 = vpop.f32.mrf.mxu0
      %v754 = vadd.f32 %v292, %v753
      %v755 = vpop.f32.mrf.mxu0
      %756 = vmatprep.mubr.f32.mxu0 0.0
      %757 = vmatmul.mubr.f32.gmra.mxu0 %v419
      %v758 = vpop.f32.mrf.mxu0
      %v759 = vadd.f32 %v292, %v758
      %v760 = vpop.f32.mrf.mxu0
      %761 = vmatprep.mubr.f32.mxu0 0.0
      %762 = vmatmul.mubr.f32.gmra.mxu0 %v422
      %v763 = vpop.f32.mrf.mxu0
      %v764 = vadd.f32 %v292, %v763
      %v765 = vpop.f32.mrf.mxu0
      %766 = vmatprep.mubr.f32.mxu0 0.0
      %767 = vmatmul.mubr.f32.gmra.mxu0 %v425
      %v768 = vpop.f32.mrf.mxu0
      %v769 = vadd.f32 %v292, %v768
      %v770 = vpop.f32.mrf.mxu0
      %771 = vmatprep.mubr.f32.mxu0 0.0
      %772 = vmatmul.mubr.f32.gmra.mxu0 %v428
      %v773 = vpop.f32.mrf.mxu0
      %v774 = vadd.f32 %v292, %v773
      %v775 = vpop.f32.mrf.mxu0
      %776 = vmatprep.mubr.f32.mxu0 0.0
      %777 = vmatmul.mubr.f32.gmra.mxu0 %v431
      %v778 = vpop.f32.mrf.mxu0
      %v779 = vadd.f32 %v292, %v778
      %v780 = vpop.f32.mrf.mxu0
      %781 = vmatprep.mubr.f32.mxu0 0.0
      %782 = vmatmul.mubr.f32.gmra.mxu0 %v434
      %v783 = vpop.f32.mrf.mxu0
      %v784 = vadd.f32 %v292, %v783
      %v785 = vpop.f32.mrf.mxu0
      %786 = vmatprep.mubr.f32.mxu0 0.0
      %787 = vmatmul.mubr.f32.gmra.mxu0 %v437
      %v788 = vpop.f32.mrf.mxu0
      %v789 = vadd.f32 %v292, %v788
      %v790 = vpop.f32.mrf.mxu0
      %791 = vmatprep.mubr.f32.mxu0 0.0
      %792 = vmatmul.mubr.f32.gmra.mxu0 %v440
      %v793 = vpop.f32.mrf.mxu0
      %v794 = vadd.f32 %v292, %v793
      %v795 = vpop.f32.mrf.mxu0
      %796 = vmatprep.mubr.f32.mxu0 0.0
      %797 = vmatmul.mubr.f32.gmra.mxu0 %v443
      %v798 = vpop.f32.mrf.mxu0
      %v799 = vadd.f32 %v292, %v798
      %v800 = vpop.f32.mrf.mxu0
      %801 = vmatprep.mubr.f32.mxu0 0.0
      %802 = vmatmul.mubr.f32.gmra.mxu0 %v446
      %v803 = vpop.f32.mrf.mxu0
      %v804 = vadd.f32 %v292, %v803
      %v805 = vpop.f32.mrf.mxu0
      %806 = vmatprep.mubr.f32.mxu0 0.0
      %807 = vmatmul.mubr.f32.gmra.mxu0 %v449
      %v808 = vpop.f32.mrf.mxu0
      %v809 = vadd.f32 %v292, %v808
      %v810 = vpop.f32.mrf.mxu0
      %811 = vmatprep.mubr.f32.mxu0 0.0
      %812 = vmatmul.mubr.f32.gmra.mxu0 %v452
      %v813 = vpop.f32.mrf.mxu0
      %v814 = vadd.f32 %v292, %v813
      %v815 = vpop.f32.mrf.mxu0
      %816 = vmatprep.mubr.f32.mxu0 0.0
      %817 = vmatmul.mubr.f32.gmra.mxu0 %v455
      %v818 = vpop.f32.mrf.mxu0
      %v819 = vadd.f32 %v292, %v818
      %v820 = vpop.f32.mrf.mxu0
      %821 = vmatprep.mubr.f32.mxu0 0.0
      %822 = vmatmul.mubr.f32.gmra.mxu0 %v458
      %v823 = vpop.f32.mrf.mxu0
      %v824 = vadd.f32 %v292, %v823
      %v825 = vpop.f32.mrf.mxu0
      %826 = vmatprep.mubr.f32.mxu0 0.0
      %827 = vmatmul.mubr.f32.gmra.mxu0 %v461
      %v828 = vpop.f32.mrf.mxu0
      %v829 = vadd.f32 %v292, %v828
      %v830 = vpop.f32.mrf.mxu0
      %831 = vmatprep.mubr.f32.mxu0 0.0
      %832 = vmatmul.mubr.f32.gmra.mxu0 %v464
      %v833 = vpop.f32.mrf.mxu0
      %v834 = vadd.f32 %v292, %v833
      %v835 = vpop.f32.mrf.mxu0
      %836 = vmatprep.mubr.f32.mxu0 0.0
      %837 = vmatmul.mubr.f32.gmra.mxu0 %v467
      %v838 = vpop.f32.mrf.mxu0
      %v839 = vadd.f32 %v292, %v838
      %v840 = vpop.f32.mrf.mxu0
      %841 = vmatprep.mubr.f32.mxu0 0.0
      %842 = vmatmul.mubr.f32.gmra.mxu0 %v470
      %v843 = vpop.f32.mrf.mxu0
      %v844 = vadd.f32 %v292, %v843
      %v845 = vpop.f32.mrf.mxu0
      %846 = vmatprep.mubr.f32.mxu0 0.0
      %847 = vmatmul.mubr.f32.gmra.mxu0 %v473
      %v848 = vpop.f32.mrf.mxu0
      %v849 = vadd.f32 %v292, %v848
      %v850 = vpop.f32.mrf.mxu0
      %851 = vmatprep.mubr.f32.mxu0 0.0
      %852 = vmatmul.mubr.f32.gmra.mxu0 %v476
      %v853 = vpop.f32.mrf.mxu0
      %v854 = vadd.f32 %v292, %v853
      %v855 = vpop.f32.mrf.mxu0
      %856 = vmatprep.mubr.f32.mxu0 0.0
      %857 = vmatmul.mubr.f32.gmra.mxu0 %v479
      %v858 = vpop.f32.mrf.mxu0
      %v859 = vadd.f32 %v292, %v858
      %v860 = vpop.f32.mrf.mxu0
      %861 = vmatprep.mubr.f32.mxu0 0.0
      %862 = vmatmul.mubr.f32.gmra.mxu0 %v482
      %v863 = vpop.f32.mrf.mxu0
      %v864 = vadd.f32 %v292, %v863
      %v865 = vpop.f32.mrf.mxu0
      %866 = vmatprep.mubr.f32.mxu0 0.0
      %867 = vmatmul.mubr.f32.gmra.mxu0 %v485
      %v868 = vpop.f32.mrf.mxu0
      %v869 = vadd.f32 %v292, %v868
      %v870 = vpop.f32.mrf.mxu0
      %871 = vdwg.mxu0
      %vm872 = vcmask 39936
      %873 = vst.msk [vmem:[%s207] sm:$0xff] %vm872, %v554
      %874 = vst.msk [vmem:[%s207 + $0x8] sm:$0xff] %vm872, %v559
      %875 = vst.msk [vmem:[%s207 + $0x10] sm:$0xff] %vm872, %v564
      %876 = vst.msk [vmem:[%s207 + $0x18] sm:$0xff] %vm872, %v569
      %877 = vst.msk [vmem:[%s207 + $0x20] sm:$0xff] %vm872, %v574
      %878 = vst.msk [vmem:[%s207 + $0x28] sm:$0xff] %vm872, %v579
      %879 = vst.msk [vmem:[%s207 + $0x30] sm:$0xff] %vm872, %v584
      %880 = vst.msk [vmem:[%s207 + $0x38] sm:$0xff] %vm872, %v589
      %881 = vst.msk [vmem:[%s207 + $0x40] sm:$0xff] %vm872, %v594
      %882 = vst.msk [vmem:[%s207 + $0x48] sm:$0xff] %vm872, %v599
      %883 = vst.msk [vmem:[%s207 + $0x50] sm:$0xff] %vm872, %v604
      %884 = vst.msk [vmem:[%s207 + $0x58] sm:$0xff] %vm872, %v609
      %885 = vst.msk [vmem:[%s207 + $0x60] sm:$0xff] %vm872, %v614
      %886 = vst.msk [vmem:[%s207 + $0x68] sm:$0xff] %vm872, %v619
      %887 = vst.msk [vmem:[%s207 + $0x70] sm:$0xff] %vm872, %v624
      %888 = vst.msk [vmem:[%s207 + $0x78] sm:$0xff] %vm872, %v629
      %889 = vst.msk [vmem:[%s207 + $0x80] sm:$0xff] %vm872, %v634
      %890 = vst.msk [vmem:[%s207 + $0x88] sm:$0xff] %vm872, %v639
      %891 = vst.msk [vmem:[%s207 + $0x90] sm:$0xff] %vm872, %v644
      %892 = vst.msk [vmem:[%s207 + $0x98] sm:$0xff] %vm872, %v649
      %893 = vst.msk [vmem:[%s207 + $0xa0] sm:$0xff] %vm872, %v654
      %894 = vst.msk [vmem:[%s207 + $0xa8] sm:$0xff] %vm872, %v659
      %895 = vst.msk [vmem:[%s207 + $0xb0] sm:$0xff] %vm872, %v664
      %896 = vst.msk [vmem:[%s207 + $0xb8] sm:$0xff] %vm872, %v669
      %897 = vst.msk [vmem:[%s207 + $0xc0] sm:$0xff] %vm872, %v674
      %898 = vst.msk [vmem:[%s207 + $0xc8] sm:$0xff] %vm872, %v679
      %899 = vst.msk [vmem:[%s207 + $0xd0] sm:$0xff] %vm872, %v684
      %900 = vst.msk [vmem:[%s207 + $0xd8] sm:$0xff] %vm872, %v689
      %901 = vst.msk [vmem:[%s207 + $0xe0] sm:$0xff] %vm872, %v694
      %902 = vst.msk [vmem:[%s207 + $0xe8] sm:$0xff] %vm872, %v699
      %903 = vst.msk [vmem:[%s207 + $0xf0] sm:$0xff] %vm872, %v704
      %904 = vst.msk [vmem:[%s207 + $0xf8] sm:$0xff] %vm872, %v709
      %905 = vst.msk [vmem:[%s207 + $0x100] sm:$0xff] %vm872, %v714
      %906 = vst.msk [vmem:[%s207 + $0x108] sm:$0xff] %vm872, %v719
      %907 = vst.msk [vmem:[%s207 + $0x110] sm:$0xff] %vm872, %v724
      %908 = vst.msk [vmem:[%s207 + $0x118] sm:$0xff] %vm872, %v729
      %909 = vst.msk [vmem:[%s207 + $0x120] sm:$0xff] %vm872, %v734
      %910 = vst.msk [vmem:[%s207 + $0x128] sm:$0xff] %vm872, %v739
      %911 = vst.msk [vmem:[%s207 + $0x130] sm:$0xff] %vm872, %v744
      %912 = vst.msk [vmem:[%s207 + $0x138] sm:$0xff] %vm872, %v749
      %913 = vst.msk [vmem:[%s207 + $0x140] sm:$0xff] %vm872, %v754
      %914 = vst.msk [vmem:[%s207 + $0x148] sm:$0xff] %vm872, %v759
      %915 = vst.msk [vmem:[%s207 + $0x150] sm:$0xff] %vm872, %v764
      %916 = vst.msk [vmem:[%s207 + $0x158] sm:$0xff] %vm872, %v769
      %917 = vst.msk [vmem:[%s207 + $0x160] sm:$0xff] %vm872, %v774
      %918 = vst.msk [vmem:[%s207 + $0x168] sm:$0xff] %vm872, %v779
      %919 = vst.msk [vmem:[%s207 + $0x170] sm:$0xff] %vm872, %v784
      %920 = vst.msk [vmem:[%s207 + $0x178] sm:$0xff] %vm872, %v789
      %921 = vst.msk [vmem:[%s207 + $0x180] sm:$0xff] %vm872, %v794
      %922 = vst.msk [vmem:[%s207 + $0x188] sm:$0xff] %vm872, %v799
      %923 = vst.msk [vmem:[%s207 + $0x190] sm:$0xff] %vm872, %v804
      %924 = vst.msk [vmem:[%s207 + $0x198] sm:$0xff] %vm872, %v809
      %925 = vst.msk [vmem:[%s207 + $0x1a0] sm:$0xff] %vm872, %v814
      %926 = vst.msk [vmem:[%s207 + $0x1a8] sm:$0xff] %vm872, %v819
      %927 = vst.msk [vmem:[%s207 + $0x1b0] sm:$0xff] %vm872, %v824
      %928 = vst.msk [vmem:[%s207 + $0x1b8] sm:$0xff] %vm872, %v829
      %929 = vst.msk [vmem:[%s207 + $0x1c0] sm:$0xff] %vm872, %v834
      %930 = vst.msk [vmem:[%s207 + $0x1c8] sm:$0xff] %vm872, %v839
      %931 = vst.msk [vmem:[%s207 + $0x1d0] sm:$0xff] %vm872, %v844
      %932 = vst.msk [vmem:[%s207 + $0x1d8] sm:$0xff] %vm872, %v849
      %933 = vst.msk [vmem:[%s207 + $0x1e0] sm:$0xff] %vm872, %v854
      %934 = vst.msk [vmem:[%s207 + $0x1e8] sm:$0xff] %vm872, %v859
      %935 = vst.msk [vmem:[%s207 + $0x1f0] sm:$0xff] %vm872, %v864
      %936 = vst.msk [vmem:[%s207 + $0x1f8] sm:$0xff] %vm872, %v869
      %1001 = vrot.lane.b32.xlu0 %v554, 123
      %v1002 = vpop.permute.xlu0 %1001
      %1003 = vrot.lane.b32.xlu0 %v559, 123
      %v1004 = vpop.permute.xlu0 %1003
      %1005 = vrot.lane.b32.xlu0 %v564, 123
      %v1006 = vpop.permute.xlu0 %1005
      %1007 = vrot.lane.b32.xlu0 %v569, 123
      %v1008 = vpop.permute.xlu0 %1007
      %1009 = vrot.lane.b32.xlu0 %v574, 123
      %v1010 = vpop.permute.xlu0 %1009
      %1011 = vrot.lane.b32.xlu0 %v579, 123
      %v1012 = vpop.permute.xlu0 %1011
      %1013 = vrot.lane.b32.xlu0 %v584, 123
      %v1014 = vpop.permute.xlu0 %1013
      %1015 = vrot.lane.b32.xlu0 %v589, 123
      %v1016 = vpop.permute.xlu0 %1015
      %1017 = vrot.lane.b32.xlu0 %v594, 123
      %v1018 = vpop.permute.xlu0 %1017
      %1019 = vrot.lane.b32.xlu0 %v599, 123
      %v1020 = vpop.permute.xlu0 %1019
      %1021 = vrot.lane.b32.xlu0 %v604, 123
      %v1022 = vpop.permute.xlu0 %1021
      %1023 = vrot.lane.b32.xlu0 %v609, 123
      %v1024 = vpop.permute.xlu0 %1023
      %1025 = vrot.lane.b32.xlu0 %v614, 123
      %v1026 = vpop.permute.xlu0 %1025
      %1027 = vrot.lane.b32.xlu0 %v619, 123
      %v1028 = vpop.permute.xlu0 %1027
      %1029 = vrot.lane.b32.xlu0 %v624, 123
      %v1030 = vpop.permute.xlu0 %1029
      %1031 = vrot.lane.b32.xlu0 %v629, 123
      %v1032 = vpop.permute.xlu0 %1031
      %1033 = vrot.lane.b32.xlu0 %v634, 123
      %v1034 = vpop.permute.xlu0 %1033
      %1035 = vrot.lane.b32.xlu0 %v639, 123
      %v1036 = vpop.permute.xlu0 %1035
      %1037 = vrot.lane.b32.xlu0 %v644, 123
      %v1038 = vpop.permute.xlu0 %1037
      %1039 = vrot.lane.b32.xlu0 %v649, 123
      %v1040 = vpop.permute.xlu0 %1039
      %1041 = vrot.lane.b32.xlu0 %v654, 123
      %v1042 = vpop.permute.xlu0 %1041
      %1043 = vrot.lane.b32.xlu0 %v659, 123
      %v1044 = vpop.permute.xlu0 %1043
      %1045 = vrot.lane.b32.xlu0 %v664, 123
      %v1046 = vpop.permute.xlu0 %1045
      %1047 = vrot.lane.b32.xlu0 %v669, 123
      %v1048 = vpop.permute.xlu0 %1047
      %1049 = vrot.lane.b32.xlu0 %v674, 123
      %v1050 = vpop.permute.xlu0 %1049
      %1051 = vrot.lane.b32.xlu0 %v679, 123
      %v1052 = vpop.permute.xlu0 %1051
      %1053 = vrot.lane.b32.xlu0 %v684, 123
      %v1054 = vpop.permute.xlu0 %1053
      %1055 = vrot.lane.b32.xlu0 %v689, 123
      %v1056 = vpop.permute.xlu0 %1055
      %1057 = vrot.lane.b32.xlu0 %v694, 123
      %v1058 = vpop.permute.xlu0 %1057
      %1059 = vrot.lane.b32.xlu0 %v699, 123
      %v1060 = vpop.permute.xlu0 %1059
      %1061 = vrot.lane.b32.xlu0 %v704, 123
      %v1062 = vpop.permute.xlu0 %1061
      %1063 = vrot.lane.b32.xlu0 %v709, 123
      %v1064 = vpop.permute.xlu0 %1063
      %1065 = vrot.lane.b32.xlu0 %v714, 123
      %v1066 = vpop.permute.xlu0 %1065
      %1067 = vrot.lane.b32.xlu0 %v719, 123
      %v1068 = vpop.permute.xlu0 %1067
      %1069 = vrot.lane.b32.xlu0 %v724, 123
      %v1070 = vpop.permute.xlu0 %1069
      %1071 = vrot.lane.b32.xlu0 %v729, 123
      %v1072 = vpop.permute.xlu0 %1071
      %1073 = vrot.lane.b32.xlu0 %v734, 123
      %v1074 = vpop.permute.xlu0 %1073
      %1075 = vrot.lane.b32.xlu0 %v739, 123
      %v1076 = vpop.permute.xlu0 %1075
      %1077 = vrot.lane.b32.xlu0 %v744, 123
      %v1078 = vpop.permute.xlu0 %1077
      %1079 = vrot.lane.b32.xlu0 %v749, 123
      %v1080 = vpop.permute.xlu0 %1079
      %1081 = vrot.lane.b32.xlu0 %v754, 123
      %v1082 = vpop.permute.xlu0 %1081
      %1083 = vrot.lane.b32.xlu0 %v759, 123
      %v1084 = vpop.permute.xlu0 %1083
      %1085 = vrot.lane.b32.xlu0 %v764, 123
      %v1086 = vpop.permute.xlu0 %1085
      %1087 = vrot.lane.b32.xlu0 %v769, 123
      %v1088 = vpop.permute.xlu0 %1087
      %1089 = vrot.lane.b32.xlu0 %v774, 123
      %v1090 = vpop.permute.xlu0 %1089
      %1091 = vrot.lane.b32.xlu0 %v779, 123
      %v1092 = vpop.permute.xlu0 %1091
      %1093 = vrot.lane.b32.xlu0 %v784, 123
      %v1094 = vpop.permute.xlu0 %1093
      %1095 = vrot.lane.b32.xlu0 %v789, 123
      %v1096 = vpop.permute.xlu0 %1095
      %1097 = vrot.lane.b32.xlu0 %v794, 123
      %v1098 = vpop.permute.xlu0 %1097
      %1099 = vrot.lane.b32.xlu0 %v799, 123
      %v1100 = vpop.permute.xlu0 %1099
      %1101 = vrot.lane.b32.xlu0 %v804, 123
      %v1102 = vpop.permute.xlu0 %1101
      %1103 = vrot.lane.b32.xlu0 %v809, 123
      %v1104 = vpop.permute.xlu0 %1103
      %1105 = vrot.lane.b32.xlu0 %v814, 123
      %v1106 = vpop.permute.xlu0 %1105
      %1107 = vrot.lane.b32.xlu0 %v819, 123
      %v1108 = vpop.permute.xlu0 %1107
      %1109 = vrot.lane.b32.xlu0 %v824, 123
      %v1110 = vpop.permute.xlu0 %1109
      %1111 = vrot.lane.b32.xlu0 %v829, 123
      %v1112 = vpop.permute.xlu0 %1111
      %1113 = vrot.lane.b32.xlu0 %v834, 123
      %v1114 = vpop.permute.xlu0 %1113
      %1115 = vrot.lane.b32.xlu0 %v839, 123
      %v1116 = vpop.permute.xlu0 %1115
      %1117 = vrot.lane.b32.xlu0 %v844, 123
      %v1118 = vpop.permute.xlu0 %1117
      %1119 = vrot.lane.b32.xlu0 %v849, 123
      %v1120 = vpop.permute.xlu0 %1119
      %1121 = vrot.lane.b32.xlu0 %v854, 123
      %v1122 = vpop.permute.xlu0 %1121
      %1123 = vrot.lane.b32.xlu0 %v859, 123
      %v1124 = vpop.permute.xlu0 %1123
      %1125 = vrot.lane.b32.xlu0 %v864, 123
      %v1126 = vpop.permute.xlu0 %1125
      %1127 = vrot.lane.b32.xlu0 %v869, 123
      %v1128 = vpop.permute.xlu0 %1127
      %vm1193 = vcmask 130048
      %1194 = vst.msk [vmem:[%s213] sm:$0xff] %vm1193, %v1002
      %1195 = vst.msk [vmem:[%s213 + $0x8] sm:$0xff] %vm1193, %v1004
      %1196 = vst.msk [vmem:[%s213 + $0x10] sm:$0xff] %vm1193, %v1006
      %1197 = vst.msk [vmem:[%s213 + $0x18] sm:$0xff] %vm1193, %v1008
      %1198 = vst.msk [vmem:[%s213 + $0x20] sm:$0xff] %vm1193, %v1010
      %1199 = vst.msk [vmem:[%s213 + $0x28] sm:$0xff] %vm1193, %v1012
      %1200 = vst.msk [vmem:[%s213 + $0x30] sm:$0xff] %vm1193, %v1014
      %1201 = vst.msk [vmem:[%s213 + $0x38] sm:$0xff] %vm1193, %v1016
      %1202 = vst.msk [vmem:[%s213 + $0x40] sm:$0xff] %vm1193, %v1018
      %1203 = vst.msk [vmem:[%s213 + $0x48] sm:$0xff] %vm1193, %v1020
      %1204 = vst.msk [vmem:[%s213 + $0x50] sm:$0xff] %vm1193, %v1022
      %1205 = vst.msk [vmem:[%s213 + $0x58] sm:$0xff] %vm1193, %v1024
      %1206 = vst.msk [vmem:[%s213 + $0x60] sm:$0xff] %vm1193, %v1026
      %1207 = vst.msk [vmem:[%s213 + $0x68] sm:$0xff] %vm1193, %v1028
      %1208 = vst.msk [vmem:[%s213 + $0x70] sm:$0xff] %vm1193, %v1030
      %1209 = vst.msk [vmem:[%s213 + $0x78] sm:$0xff] %vm1193, %v1032
      %1210 = vst.msk [vmem:[%s213 + $0x80] sm:$0xff] %vm1193, %v1034
      %1211 = vst.msk [vmem:[%s213 + $0x88] sm:$0xff] %vm1193, %v1036
      %1212 = vst.msk [vmem:[%s213 + $0x90] sm:$0xff] %vm1193, %v1038
      %1213 = vst.msk [vmem:[%s213 + $0x98] sm:$0xff] %vm1193, %v1040
      %1214 = vst.msk [vmem:[%s213 + $0xa0] sm:$0xff] %vm1193, %v1042
      %1215 = vst.msk [vmem:[%s213 + $0xa8] sm:$0xff] %vm1193, %v1044
      %1216 = vst.msk [vmem:[%s213 + $0xb0] sm:$0xff] %vm1193, %v1046
      %1217 = vst.msk [vmem:[%s213 + $0xb8] sm:$0xff] %vm1193, %v1048
      %1218 = vst.msk [vmem:[%s213 + $0xc0] sm:$0xff] %vm1193, %v1050
      %1219 = vst.msk [vmem:[%s213 + $0xc8] sm:$0xff] %vm1193, %v1052
      %1220 = vst.msk [vmem:[%s213 + $0xd0] sm:$0xff] %vm1193, %v1054
      %1221 = vst.msk [vmem:[%s213 + $0xd8] sm:$0xff] %vm1193, %v1056
      %1222 = vst.msk [vmem:[%s213 + $0xe0] sm:$0xff] %vm1193, %v1058
      %1223 = vst.msk [vmem:[%s213 + $0xe8] sm:$0xff] %vm1193, %v1060
      %1224 = vst.msk [vmem:[%s213 + $0xf0] sm:$0xff] %vm1193, %v1062
      %1225 = vst.msk [vmem:[%s213 + $0xf8] sm:$0xff] %vm1193, %v1064
      %1226 = vst.msk [vmem:[%s213 + $0x100] sm:$0xff] %vm1193, %v1066
      %1227 = vst.msk [vmem:[%s213 + $0x108] sm:$0xff] %vm1193, %v1068
      %1228 = vst.msk [vmem:[%s213 + $0x110] sm:$0xff] %vm1193, %v1070
      %1229 = vst.msk [vmem:[%s213 + $0x118] sm:$0xff] %vm1193, %v1072
      %1230 = vst.msk [vmem:[%s213 + $0x120] sm:$0xff] %vm1193, %v1074
      %1231 = vst.msk [vmem:[%s213 + $0x128] sm:$0xff] %vm1193, %v1076
      %1232 = vst.msk [vmem:[%s213 + $0x130] sm:$0xff] %vm1193, %v1078
      %1233 = vst.msk [vmem:[%s213 + $0x138] sm:$0xff] %vm1193, %v1080
      %1234 = vst.msk [vmem:[%s213 + $0x140] sm:$0xff] %vm1193, %v1082
      %1235 = vst.msk [vmem:[%s213 + $0x148] sm:$0xff] %vm1193, %v1084
      %1236 = vst.msk [vmem:[%s213 + $0x150] sm:$0xff] %vm1193, %v1086
      %1237 = vst.msk [vmem:[%s213 + $0x158] sm:$0xff] %vm1193, %v1088
      %1238 = vst.msk [vmem:[%s213 + $0x160] sm:$0xff] %vm1193, %v1090
      %1239 = vst.msk [vmem:[%s213 + $0x168] sm:$0xff] %vm1193, %v1092
      %1240 = vst.msk [vmem:[%s213 + $0x170] sm:$0xff] %vm1193, %v1094
      %1241 = vst.msk [vmem:[%s213 + $0x178] sm:$0xff] %vm1193, %v1096
      %1242 = vst.msk [vmem:[%s213 + $0x180] sm:$0xff] %vm1193, %v1098
      %1243 = vst.msk [vmem:[%s213 + $0x188] sm:$0xff] %vm1193, %v1100
      %1244 = vst.msk [vmem:[%s213 + $0x190] sm:$0xff] %vm1193, %v1102
      %1245 = vst.msk [vmem:[%s213 + $0x198] sm:$0xff] %vm1193, %v1104
      %1246 = vst.msk [vmem:[%s213 + $0x1a0] sm:$0xff] %vm1193, %v1106
      %1247 = vst.msk [vmem:[%s213 + $0x1a8] sm:$0xff] %vm1193, %v1108
      %1248 = vst.msk [vmem:[%s213 + $0x1b0] sm:$0xff] %vm1193, %v1110
      %1249 = vst.msk [vmem:[%s213 + $0x1b8] sm:$0xff] %vm1193, %v1112
      %1250 = vst.msk [vmem:[%s213 + $0x1c0] sm:$0xff] %vm1193, %v1114
      %1251 = vst.msk [vmem:[%s213 + $0x1c8] sm:$0xff] %vm1193, %v1116
      %1252 = vst.msk [vmem:[%s213 + $0x1d0] sm:$0xff] %vm1193, %v1118
      %1253 = vst.msk [vmem:[%s213 + $0x1d8] sm:$0xff] %vm1193, %v1120
      %1254 = vst.msk [vmem:[%s213 + $0x1e0] sm:$0xff] %vm1193, %v1122
      %1255 = vst.msk [vmem:[%s213 + $0x1e8] sm:$0xff] %vm1193, %v1124
      %1256 = vst.msk [vmem:[%s213 + $0x1f0] sm:$0xff] %vm1193, %v1126
      %1257 = vst.msk [vmem:[%s213 + $0x1f8] sm:$0xff] %vm1193, %v1128
      %s1258 = smul.u32 64, %s16
      %p1259 = scmp.lt.s32.totalorder %s1258, 127
      %s1260 = scalar_select %p1259, %s1258, 127
      %s1261 = smul.addr %s1260, 8
      %s1262 = scalar_lea.vmem %s3, %s1261
      %s1263 = smul.u32 64, %s16
      %p1264 = scmp.lt.s32.totalorder %s1263, 127
      %s1265 = scalar_select %p1264, %s1263, 127
      %s1266 = smul.addr %s1265, 8
      %s1267 = scalar_lea.vmem %s4, %s1266
      // Predicated region
      $region33: #{action_head_forward.1} parent=31 // pred_check
        %p1268 = pneg %p102
      $region34: #{action_head_forward.1} parent=31 // pred_check_branch
        %1270 = sbr.rel (%p1268) target = $region36
      $region35: #{action_head_forward.1} parent=31 // pred_region
        %s1271 = smul.u32 64, %s16
      $region36: #{action_head_forward.1} parent=31 // pred_fallthru
        _
      // Predicated region
      $region37: #{action_head_forward.1} parent=31 // pred_check
        %p1272 = pneg %p128
      $region38: #{action_head_forward.1} parent=31 // pred_check_branch
        %1274 = sbr.rel (%p1272) target = $region40
      $region39: #{action_head_forward.1} parent=31 // pred_region
        %s1275 = smul.u32 64, %s16
      $region40: #{action_head_forward.1} parent=31 // pred_fallthru
        _
    $region32: #{action_head_forward.1} parent=5 // pred_fallthru
      _
    %p1276 = scmp.le.s32.totalorder 2, %s11
    // Predicated region
    $region41: #{action_head_forward.1} parent=5 // pred_check
      %p1277 = pneg %p1276
    $region42: #{action_head_forward.1} parent=5 // pred_check_branch
      %1279 = sbr.rel (%p1277) target = $region44
    $region43: #{action_head_forward.1} parent=5 // pred_region
      %s1280 = ssub.s32 %s11, 2
      // Predicated region
      $region45: #{action_head_forward.1} parent=43 // pred_check
        %p1281 = pneg %p108
      $region46: #{action_head_forward.1} parent=43 // pred_check_branch
        %1283 = sbr.rel (%p1281) target = $region48
      $region47: #{action_head_forward.1} parent=43 // pred_region
        %s1284 = smul.u32 64, %s17
        %p1285 = scmp.lt.s32.totalorder %s1284, 127
        %s1286 = scalar_select %p1285, %s1284, 127
        %s1287 = smul.addr %s1286, 8
        %s1288 = scalar_lea.vmem %s3, %s1287
      $region48: #{action_head_forward.1} parent=43 // pred_fallthru
        _
      // Predicated region
      $region49: #{action_head_forward.1} parent=43 // pred_check
        %p1289 = pneg %p134
      $region50: #{action_head_forward.1} parent=43 // pred_check_branch
        %1291 = sbr.rel (%p1289) target = $region52
      $region51: #{action_head_forward.1} parent=43 // pred_region
        %s1292 = smul.u32 64, %s17
        %p1293 = scmp.lt.s32.totalorder %s1292, 127
        %s1294 = scalar_select %p1293, %s1292, 127
        %s1295 = smul.addr %s1294, 8
        %s1296 = scalar_lea.vmem %s4, %s1295
      $region52: #{action_head_forward.1} parent=43 // pred_fallthru
        _
    $region44: #{action_head_forward.1} parent=5 // pred_fallthru
      _
  $region6: #{action_head_forward.1} parent=0 // loop_footer
    %s15 = sadd.s32 1, %s11
  $region7: #{action_head_forward.1} parent=0 // loop_footer_branch
    %10 = sbr.rel target = $region3
  $region8: #{action_head_forward.1} parent=0 // loop_exit
    _

</llo_original>
